<compile_context>
chip_gen: v5e
topology: v5e:2x2
jax: 0.10.0
libtpu: 0.0.40
codegen_flags: <defaults>
</compile_context>

<pallas_src>
import functools

import jax
import jax.numpy as jnp
import numpy as np
from jax import lax
from jax.experimental import pallas as pl
from jax.experimental.pallas import tpu as pltpu


# ----------------------------------------------------------------------------
# Fused kernel (one whole image per grid step)
# ----------------------------------------------------------------------------
def _mix_init_kernel(colw_ref, xs_ref, wstem_ref, b1_ref, w2_ref, b2_ref,
                     w3_ref, b3_ref, o_ref, *, W, P, C, C4):
    """Fused MixInitBlock forward for one image.

    Layout: channel-major with the flattened pixel index (row-major H*W) on
    the lane axis.
      colw_ref  : (1, P) int32    pixel -> column index (precomputed)
      xs_ref    : (1, C4, P) bf16 space-to-depth input (stride-2 folded away)
      wstem_ref : (4, C, C4) bf16 stem taps, j = khb*2 + kwb
      w2_ref    : (9, C, 1) f32   depthwise taps, k = kh*3 + kw
      w3_ref    : (C, C) bf16     pointwise (BN3 folded), [co, ci]
      o_ref     : (1, C, P)       output (lane-dense store)
    """
    f32 = jnp.float32
    bf16 = jnp.bfloat16

    x = xs_ref[0]                       # (C4, P) bf16
    colw = colw_ref[...]                # (1, P)  int32

    # ---- stage 1: stem 3x3/s2 conv (4 whole-image taps) + BN1 + ReLU -------
    # Flat-offset trick: tap (khb, kwb) reads source pixel p + (khb-1)*W +
    # (kwb-1).  Negative offsets are realized with a static zero prefix; the
    # column -1 wrap-around (kwb=0 taps) is killed by zeroing column W-1 of
    # the shifted source.
    xm = x * (colw != W - 1).astype(bf16)              # source for kwb=0 taps
    zpre = jnp.zeros((C4, W + 1), bf16)
    xe = jnp.concatenate([zpre, x], axis=1)            # (C4, P + W + 1)
    xem = jnp.concatenate([zpre, xm], axis=1)

    s00 = xem[:, 0:P]                                  # (khb=0, kwb=0)
    s01 = xe[:, 1:P + 1]                               # (khb=0, kwb=1)
    s10 = xem[:, W:P + W]                              # (khb=1, kwb=0)
    s11 = x                                            # (khb=1, kwb=1)

    y1 = jnp.dot(wstem_ref[0], s00, preferred_element_type=f32)
    y1 = y1 + jnp.dot(wstem_ref[1], s01, preferred_element_type=f32)
    y1 = y1 + jnp.dot(wstem_ref[2], s10, preferred_element_type=f32)
    y1 = y1 + jnp.dot(wstem_ref[3], s11, preferred_element_type=f32)
    y1 = jnp.maximum(y1 + b1_ref[...], 0.0)            # (C, P) f32

    # ---- stage 2: depthwise 3x3 + BN2 + ReLU (pure VPU, f32) ---------------
    zrow = jnp.zeros((C, W + 1), f32)
    y1e = jnp.concatenate([zrow, y1, zrow], axis=1)    # (C, P + 2W + 2)

    def tap(kh, kw):                                   # static lane slice
        s = kh * W + kw
        return y1e[:, s:s + P]

    w2 = [w2_ref[k] for k in range(9)]                 # each (C, 1) f32
    acc_l = tap(0, 0) * w2[0] + tap(1, 0) * w2[3] + tap(2, 0) * w2[6]
    acc_c = tap(0, 1) * w2[1] + tap(1, 1) * w2[4] + tap(2, 1) * w2[7]
    acc_r = tap(0, 2) * w2[2] + tap(1, 2) * w2[5] + tap(2, 2) * w2[8]
    acc = (jnp.where(colw != 0, acc_l, 0.0) + acc_c
           + jnp.where(colw != W - 1, acc_r, 0.0))
    zact = jnp.maximum(acc + b2_ref[...], 0.0)         # (C, P) f32

    # ---- stage 3: 1x1 conv + BN3 + residual, one lane-dense store ----------
    o = jnp.dot(w3_ref[...], zact.astype(bf16), preferred_element_type=f32)
    o = o + b3_ref[...] + y1                           # identity = stem output
    o_ref[0] = o.astype(o_ref.dtype)


def _mix_init_pallas(colw, xflat, wstem, b1, w2f, b2, w3t, b3, *, W, P, C, C4,
                     out_dtype):
    N = xflat.shape[0]
    kernel = functools.partial(_mix_init_kernel, W=W, P=P, C=C, C4=C4)
    return pl.pallas_call(
        kernel,
        out_shape=jax.ShapeDtypeStruct((N, C, P), out_dtype),
        grid=(N,),
        in_specs=[
            pl.BlockSpec((1, P), lambda n: (0, 0)),            # column index
            pl.BlockSpec((1, C4, P), lambda n: (n, 0, 0)),     # s2d input
            pl.BlockSpec((4, C, C4), lambda n: (0, 0, 0)),     # stem taps
            pl.BlockSpec((C, 1), lambda n: (0, 0)),            # b1
            pl.BlockSpec((9, C, 1), lambda n: (0, 0, 0)),      # dw taps
            pl.BlockSpec((C, 1), lambda n: (0, 0)),            # b2
            pl.BlockSpec((C, C), lambda n: (0, 0)),            # w3 (folded)
            pl.BlockSpec((C, 1), lambda n: (0, 0)),            # b3
        ],
        out_specs=pl.BlockSpec((1, C, P), lambda n: (n, 0, 0)),
        # Footprint is a few MiB even at 224x224 inputs: well under the scoped
        # VMEM defaults on v5e/v6e/v7x, so no vmem_limit override is needed.
        compiler_params=pltpu.CompilerParams(
            dimension_semantics=("parallel",)),
    )(colw, xflat, wstem, b1, w2f, b2, w3t, b3)


# ----------------------------------------------------------------------------
# Module wrapper (parameters + BN folding + layout prep)
# ----------------------------------------------------------------------------
class MixInitBlockPallas:
    """MixNet initial block, inference mode, NCHW in / NCHW out."""

    def __init__(self, in_channels, out_channels, *, key, bn_eps=1e-5):
        self.cin, self.c, self.eps = in_channels, out_channels, bn_eps
        Cin, C = in_channels, out_channels
        ks = jax.random.split(key, 15)

        def uni(k, shape, fan_in):
            b = float(np.sqrt(3.0 / fan_in))
            return jax.random.uniform(k, shape, jnp.float32, -b, b)

        def init_bn(k4):
            gamma = 1.0 + 0.1 * jax.random.normal(k4[0], (C,), jnp.float32)
            beta = 0.1 * jax.random.normal(k4[1], (C,), jnp.float32)
            mean = 0.1 * jax.random.normal(k4[2], (C,), jnp.float32)
            var = 0.5 + jax.random.uniform(k4[3], (C,), jnp.float32, 0.0, 1.0)
            return (gamma, beta, mean, var)

        self.w1 = uni(ks[0], (3, 3, Cin, C), 9 * Cin)   # stem conv  (kh,kw,ci,co)
        self.bn1 = init_bn(ks[1:5])
        self.w2 = uni(ks[5], (3, 3, C), 9)              # depthwise  (kh,kw,c)
        self.bn2 = init_bn(ks[6:10])
        self.w3 = uni(ks[10], (C, C), C)                # pointwise  (ci,co)
        self.bn3 = init_bn(ks[11:15])
        self._fold_params()

    def _fold_params(self):
        """Fold inference BatchNorm into the convs; rearrange the stem weights
        for the space-to-depth (stride-2 -> stride-1 2x2) formulation."""
        Cin, C, eps = self.cin, self.c, self.eps
        C4 = 4 * Cin

        def sb(bn):
            gamma, beta, mean, var = bn
            s = gamma / jnp.sqrt(var + eps)
            return s, beta - mean * s

        s1, b1 = sb(self.bn1)
        s2, b2 = sb(self.bn2)
        s3, b3 = sb(self.bn3)

        w1f = np.asarray(self.w1 * s1[None, None, None, :])          # (3,3,Cin,C)
        w1r = np.zeros((2, 2, 2, 2, Cin, C), np.float32)             # khb,kwb,dy,dx,ci,co
        for khb in range(2):
            for dy in range(2):
                kh = 2 * khb + dy - 1
                if kh < 0:
                    continue
                for kwb in range(2):
                    for dx in range(2):
                        kw = 2 * kwb + dx - 1
                        if kw < 0:
                            continue
                        w1r[khb, kwb, dy, dx] = w1f[kh, kw]
        # wstem[j, co, c4]  with j = khb*2+kwb and c4 = (dy*2+dx)*Cin + ci
        self.wstem = jnp.asarray(
            w1r.reshape(4, C4, C).transpose(0, 2, 1)).astype(jnp.bfloat16)
        self.b1 = b1.reshape(C, 1).astype(jnp.float32)
        self.w2f = ((self.w2 * s2[None, None, :])
                    .reshape(9, C)[:, :, None].astype(jnp.float32))  # (9,C,1)
        self.b2 = b2.reshape(C, 1).astype(jnp.float32)
        self.w3t = (self.w3 * s3[None, :]).T.astype(jnp.bfloat16)    # (co,ci)
        self.b3 = b3.reshape(C, 1).astype(jnp.float32)

    def __call__(self, x_nchw):
        N, Cin, H_in, W_in = x_nchw.shape
        assert Cin == self.cin
        assert H_in % 2 == 0 and W_in % 2 == 0, "even spatial dims required"
        H, W = H_in // 2, W_in // 2
        C, C4, P = self.c, 4 * self.cin, (H_in // 2) * (W_in // 2)

        # Space-to-depth on the tiny Cin-channel input (one fused XLA pass);
        # the kernel then sees a stride-1 problem and reads/writes NCHW.
        xs2d = x_nchw.reshape(N, Cin, H, 2, W, 2)
        xs2d = jnp.transpose(xs2d, (0, 3, 5, 1, 2, 4)).reshape(N, C4, P)
        xs2d = xs2d.astype(jnp.bfloat16)                 # MXU operand dtype

        colw = (jnp.arange(P, dtype=jnp.int32) % W).reshape(1, P)

        out = _mix_init_pallas(colw, xs2d, self.wstem, self.b1, self.w2f,
                               self.b2, self.w3t, self.b3,
                               W=W, P=P, C=C, C4=C4, out_dtype=x_nchw.dtype)
        return out.reshape(N, C, H, W)


# ----------------------------------------------------------------------------
# Pure-JAX reference (lax convs, full f32 precision) for validation
# ----------------------------------------------------------------------------
def _reference(x_nchw, blk):
    eps = blk.eps
    Pr = lax.Precision.HIGHEST

    def bn(v, params):
        gamma, beta, mean, var = params
        s = gamma / jnp.sqrt(var + eps)
        return v * s[None, :, None, None] + (beta - mean * s)[None, :, None, None]

    w1 = jnp.transpose(blk.w1, (3, 2, 0, 1))                      # OIHW
    y = lax.conv_general_dilated(x_nchw, w1, (2, 2), [(1, 1), (1, 1)],
                                 dimension_numbers=("NCHW", "OIHW", "NCHW"),
                                 precision=Pr)
    y = jax.nn.relu(bn(y, blk.bn1))
    identity = y

    w2 = jnp.transpose(blk.w2, (2, 0, 1))[:, None, :, :]          # (C,1,3,3)
    z = lax.conv_general_dilated(y, w2, (1, 1), [(1, 1), (1, 1)],
                                 dimension_numbers=("NCHW", "OIHW", "NCHW"),
                                 feature_group_count=blk.c, precision=Pr)
    z = jax.nn.relu(bn(z, blk.bn2))

    w3 = jnp.transpose(blk.w3, (1, 0))[:, :, None, None]          # (co,ci,1,1)
    o = lax.conv_general_dilated(z, w3, (1, 1), [(0, 0), (0, 0)],
                                 dimension_numbers=("NCHW", "OIHW", "NCHW"),
                                 precision=Pr)
    o = bn(o, blk.bn3)
    return o + identity


if __name__ == "__main__":
    key = jax.random.PRNGKey(0)
    kparam, kx = jax.random.split(key)

    N, Cin, H_in, W_in = 2, 3, 32, 32
    C = 16
    block = MixInitBlockPallas(Cin, C, key=kparam)
    x = jax.random.normal(kx, (N, Cin, H_in, W_in), jnp.float32)

    y = jax.jit(block.__call__)(x)
    y = jax.block_until_ready(y)

    y_ref = jax.block_until_ready(_reference(x, block))
    assert y.shape == (N, C, H_in // 2, W_in // 2)
    # bf16 MXU operands (f32 accumulation) vs f32 HIGHEST reference.
    np.testing.assert_allclose(np.asarray(y), np.asarray(y_ref),
                               atol=5e-2, rtol=5e-2)

    print("KERNEL_OK")
</pallas_src>

<mosaic_0001>
module attributes {stable_mosaic.version = 11 : i64} {
  func.func @_mix_init_kernel(%arg0: i32, %arg1: memref<1x256xi32, #tpu.memory_space<vmem>>, %arg2: memref<1x12x256xbf16, #tpu.memory_space<vmem>>, %arg3: memref<4x16x12xbf16, #tpu.memory_space<vmem>>, %arg4: memref<16x1xf32, #tpu.memory_space<vmem>>, %arg5: memref<9x16x1xf32, #tpu.memory_space<vmem>>, %arg6: memref<16x1xf32, #tpu.memory_space<vmem>>, %arg7: memref<16x16xbf16, #tpu.memory_space<vmem>>, %arg8: memref<16x1xf32, #tpu.memory_space<vmem>>, %arg9: memref<1x16x256xf32, #tpu.memory_space<vmem>>) attributes {dimension_semantics = [#tpu.dimension_semantics<parallel>], iteration_bounds = array<i64: 2>, scalar_prefetch = 0 : i64, scratch_operands = 0 : i64, tpu.core_type = #tpu.core_type<tc>, window_params = [{pipeline_mode = #tpu.pipeline_mode<synchronous>, transform_indices = @transform_0, window_bounds = array<i64: 1, 256>}, {transform_indices = @transform_1, window_bounds = array<i64: 1, 12, 256>}, {pipeline_mode = #tpu.pipeline_mode<synchronous>, transform_indices = @transform_2, window_bounds = array<i64: 4, 16, 12>}, {pipeline_mode = #tpu.pipeline_mode<synchronous>, transform_indices = @transform_3, window_bounds = array<i64: 16, 1>}, {pipeline_mode = #tpu.pipeline_mode<synchronous>, transform_indices = @transform_4, window_bounds = array<i64: 9, 16, 1>}, {pipeline_mode = #tpu.pipeline_mode<synchronous>, transform_indices = @transform_5, window_bounds = array<i64: 16, 1>}, {pipeline_mode = #tpu.pipeline_mode<synchronous>, transform_indices = @transform_6, window_bounds = array<i64: 16, 16>}, {pipeline_mode = #tpu.pipeline_mode<synchronous>, transform_indices = @transform_7, window_bounds = array<i64: 16, 1>}, {transform_indices = @transform_8, window_bounds = array<i64: 1, 16, 256>}]} {
    %c0 = arith.constant 0 : index
    %c0_0 = arith.constant 0 : index
    %c0_1 = arith.constant 0 : index
    %0 = vector.load %arg2[%c0, %c0_0, %c0_1] : memref<1x12x256xbf16, #tpu.memory_space<vmem>>, vector<1x12x256xbf16>
    %1 = vector.shape_cast %0 : vector<1x12x256xbf16> to vector<12x256xbf16>
    %c0_2 = arith.constant 0 : index
    %c0_3 = arith.constant 0 : index
    %2 = vector.load %arg1[%c0_2, %c0_3] : memref<1x256xi32, #tpu.memory_space<vmem>>, vector<1x256xi32>
    %c15_i32 = arith.constant 15 : i32
    %3 = vector.broadcast %c15_i32 : i32 to vector<1x256xi32>
    %4 = arith.cmpi ne, %2, %3 : vector<1x256xi32>
    %5 = arith.extui %4 : vector<1x256xi1> to vector<1x256xi32>
    %6 = arith.sitofp %5 : vector<1x256xi32> to vector<1x256xf32>
    %7 = arith.truncf %6 : vector<1x256xf32> to vector<1x256xbf16>
    %8 = vector.broadcast %7 : vector<1x256xbf16> to vector<12x256xbf16>
    %9 = arith.mulf %1, %8 : vector<12x256xbf16>
    %cst = arith.constant 0.000000e+00 : bf16
    %10 = vector.broadcast %cst : bf16 to vector<12x17xbf16>
    %11 = tpu.concatenate %10, %1 in 1 : vector<12x17xbf16>, vector<12x256xbf16> -> vector<12x273xbf16>
    %12 = tpu.concatenate %10, %9 in 1 : vector<12x17xbf16>, vector<12x256xbf16> -> vector<12x273xbf16>
    %13 = vector.extract_strided_slice %12 {offsets = [0, 0], sizes = [12, 256], strides = [1, 1]} : vector<12x273xbf16> to vector<12x256xbf16>
    %14 = vector.extract_strided_slice %11 {offsets = [0, 1], sizes = [12, 256], strides = [1, 1]} : vector<12x273xbf16> to vector<12x256xbf16>
    %15 = vector.extract_strided_slice %12 {offsets = [0, 16], sizes = [12, 256], strides = [1, 1]} : vector<12x273xbf16> to vector<12x256xbf16>
    %c0_4 = arith.constant 0 : index
    %c0_5 = arith.constant 0 : index
    %c0_6 = arith.constant 0 : index
    %16 = vector.load %arg3[%c0_4, %c0_5, %c0_6] : memref<4x16x12xbf16, #tpu.memory_space<vmem>>, vector<1x16x12xbf16>
    %17 = vector.shape_cast %16 : vector<1x16x12xbf16> to vector<16x12xbf16>
    %cst_7 = arith.constant dense<0.000000e+00> : vector<16x256xf32>
    %18 = tpu.matmul %17, %13, %cst_7 {dimension_numbers = #tpu.dot_dimension_numbers<[1], [0], [0], [1], [0, 0, 1, 1], [], []>} : vector<16x12xbf16>, vector<12x256xbf16>, vector<16x256xf32> -> vector<16x256xf32>
    %c1 = arith.constant 1 : index
    %c0_8 = arith.constant 0 : index
    %c0_9 = arith.constant 0 : index
    %19 = vector.load %arg3[%c1, %c0_8, %c0_9] : memref<4x16x12xbf16, #tpu.memory_space<vmem>>, vector<1x16x12xbf16>
    %20 = vector.shape_cast %19 : vector<1x16x12xbf16> to vector<16x12xbf16>
    %cst_10 = arith.constant dense<0.000000e+00> : vector<16x256xf32>
    %21 = tpu.matmul %20, %14, %cst_10 {dimension_numbers = #tpu.dot_dimension_numbers<[1], [0], [0], [1], [0, 0, 1, 1], [], []>} : vector<16x12xbf16>, vector<12x256xbf16>, vector<16x256xf32> -> vector<16x256xf32>
    %22 = arith.addf %18, %21 : vector<16x256xf32>
    %c2 = arith.constant 2 : index
    %c0_11 = arith.constant 0 : index
    %c0_12 = arith.constant 0 : index
    %23 = vector.load %arg3[%c2, %c0_11, %c0_12] : memref<4x16x12xbf16, #tpu.memory_space<vmem>>, vector<1x16x12xbf16>
    %24 = vector.shape_cast %23 : vector<1x16x12xbf16> to vector<16x12xbf16>
    %cst_13 = arith.constant dense<0.000000e+00> : vector<16x256xf32>
    %25 = tpu.matmul %24, %15, %cst_13 {dimension_numbers = #tpu.dot_dimension_numbers<[1], [0], [0], [1], [0, 0, 1, 1], [], []>} : vector<16x12xbf16>, vector<12x256xbf16>, vector<16x256xf32> -> vector<16x256xf32>
    %26 = arith.addf %22, %25 : vector<16x256xf32>
    %c3 = arith.constant 3 : index
    %c0_14 = arith.constant 0 : index
    %c0_15 = arith.constant 0 : index
    %27 = vector.load %arg3[%c3, %c0_14, %c0_15] : memref<4x16x12xbf16, #tpu.memory_space<vmem>>, vector<1x16x12xbf16>
    %28 = vector.shape_cast %27 : vector<1x16x12xbf16> to vector<16x12xbf16>
    %cst_16 = arith.constant dense<0.000000e+00> : vector<16x256xf32>
    %29 = tpu.matmul %28, %1, %cst_16 {dimension_numbers = #tpu.dot_dimension_numbers<[1], [0], [0], [1], [0, 0, 1, 1], [], []>} : vector<16x12xbf16>, vector<12x256xbf16>, vector<16x256xf32> -> vector<16x256xf32>
    %30 = arith.addf %26, %29 : vector<16x256xf32>
    %c0_17 = arith.constant 0 : index
    %c0_18 = arith.constant 0 : index
    %31 = vector.load %arg4[%c0_17, %c0_18] : memref<16x1xf32, #tpu.memory_space<vmem>>, vector<16x1xf32>
    %32 = vector.broadcast %31 : vector<16x1xf32> to vector<16x256xf32>
    %33 = arith.addf %30, %32 : vector<16x256xf32>
    %cst_19 = arith.constant 0.000000e+00 : f32
    %34 = vector.broadcast %cst_19 : f32 to vector<16x256xf32>
    %35 = arith.maximumf %33, %34 : vector<16x256xf32>
    %cst_20 = arith.constant 0.000000e+00 : f32
    %36 = vector.broadcast %cst_20 : f32 to vector<16x17xf32>
    %37 = tpu.concatenate %36, %35, %36 in 1 : vector<16x17xf32>, vector<16x256xf32>, vector<16x17xf32> -> vector<16x290xf32>
    %c0_21 = arith.constant 0 : index
    %c0_22 = arith.constant 0 : index
    %c0_23 = arith.constant 0 : index
    %38 = vector.load %arg5[%c0_21, %c0_22, %c0_23] : memref<9x16x1xf32, #tpu.memory_space<vmem>>, vector<1x16x1xf32>
    %39 = vector.shape_cast %38 : vector<1x16x1xf32> to vector<16x1xf32>
    %c1_24 = arith.constant 1 : index
    %c0_25 = arith.constant 0 : index
    %c0_26 = arith.constant 0 : index
    %40 = vector.load %arg5[%c1_24, %c0_25, %c0_26] : memref<9x16x1xf32, #tpu.memory_space<vmem>>, vector<1x16x1xf32>
    %41 = vector.shape_cast %40 : vector<1x16x1xf32> to vector<16x1xf32>
    %c2_27 = arith.constant 2 : index
    %c0_28 = arith.constant 0 : index
    %c0_29 = arith.constant 0 : index
    %42 = vector.load %arg5[%c2_27, %c0_28, %c0_29] : memref<9x16x1xf32, #tpu.memory_space<vmem>>, vector<1x16x1xf32>
    %43 = vector.shape_cast %42 : vector<1x16x1xf32> to vector<16x1xf32>
    %c3_30 = arith.constant 3 : index
    %c0_31 = arith.constant 0 : index
    %c0_32 = arith.constant 0 : index
    %44 = vector.load %arg5[%c3_30, %c0_31, %c0_32] : memref<9x16x1xf32, #tpu.memory_space<vmem>>, vector<1x16x1xf32>
    %45 = vector.shape_cast %44 : vector<1x16x1xf32> to vector<16x1xf32>
    %c4 = arith.constant 4 : index
    %c0_33 = arith.constant 0 : index
    %c0_34 = arith.constant 0 : index
    %46 = vector.load %arg5[%c4, %c0_33, %c0_34] : memref<9x16x1xf32, #tpu.memory_space<vmem>>, vector<1x16x1xf32>
    %47 = vector.shape_cast %46 : vector<1x16x1xf32> to vector<16x1xf32>
    %c5 = arith.constant 5 : index
    %c0_35 = arith.constant 0 : index
    %c0_36 = arith.constant 0 : index
    %48 = vector.load %arg5[%c5, %c0_35, %c0_36] : memref<9x16x1xf32, #tpu.memory_space<vmem>>, vector<1x16x1xf32>
    %49 = vector.shape_cast %48 : vector<1x16x1xf32> to vector<16x1xf32>
    %c6 = arith.constant 6 : index
    %c0_37 = arith.constant 0 : index
    %c0_38 = arith.constant 0 : index
    %50 = vector.load %arg5[%c6, %c0_37, %c0_38] : memref<9x16x1xf32, #tpu.memory_space<vmem>>, vector<1x16x1xf32>
    %51 = vector.shape_cast %50 : vector<1x16x1xf32> to vector<16x1xf32>
    %c7 = arith.constant 7 : index
    %c0_39 = arith.constant 0 : index
    %c0_40 = arith.constant 0 : index
    %52 = vector.load %arg5[%c7, %c0_39, %c0_40] : memref<9x16x1xf32, #tpu.memory_space<vmem>>, vector<1x16x1xf32>
    %53 = vector.shape_cast %52 : vector<1x16x1xf32> to vector<16x1xf32>
    %c8 = arith.constant 8 : index
    %c0_41 = arith.constant 0 : index
    %c0_42 = arith.constant 0 : index
    %54 = vector.load %arg5[%c8, %c0_41, %c0_42] : memref<9x16x1xf32, #tpu.memory_space<vmem>>, vector<1x16x1xf32>
    %55 = vector.shape_cast %54 : vector<1x16x1xf32> to vector<16x1xf32>
    %56 = vector.extract_strided_slice %37 {offsets = [0, 0], sizes = [16, 256], strides = [1, 1]} : vector<16x290xf32> to vector<16x256xf32>
    %57 = vector.broadcast %39 : vector<16x1xf32> to vector<16x256xf32>
    %58 = arith.mulf %56, %57 : vector<16x256xf32>
    %59 = vector.extract_strided_slice %37 {offsets = [0, 16], sizes = [16, 256], strides = [1, 1]} : vector<16x290xf32> to vector<16x256xf32>
    %60 = vector.broadcast %45 : vector<16x1xf32> to vector<16x256xf32>
    %61 = arith.mulf %59, %60 : vector<16x256xf32>
    %62 = arith.addf %58, %61 : vector<16x256xf32>
    %63 = vector.extract_strided_slice %37 {offsets = [0, 32], sizes = [16, 256], strides = [1, 1]} : vector<16x290xf32> to vector<16x256xf32>
    %64 = vector.broadcast %51 : vector<16x1xf32> to vector<16x256xf32>
    %65 = arith.mulf %63, %64 : vector<16x256xf32>
    %66 = arith.addf %62, %65 : vector<16x256xf32>
    %67 = vector.extract_strided_slice %37 {offsets = [0, 1], sizes = [16, 256], strides = [1, 1]} : vector<16x290xf32> to vector<16x256xf32>
    %68 = vector.broadcast %41 : vector<16x1xf32> to vector<16x256xf32>
    %69 = arith.mulf %67, %68 : vector<16x256xf32>
    %70 = vector.extract_strided_slice %37 {offsets = [0, 17], sizes = [16, 256], strides = [1, 1]} : vector<16x290xf32> to vector<16x256xf32>
    %71 = vector.broadcast %47 : vector<16x1xf32> to vector<16x256xf32>
    %72 = arith.mulf %70, %71 : vector<16x256xf32>
    %73 = arith.addf %69, %72 : vector<16x256xf32>
    %74 = vector.extract_strided_slice %37 {offsets = [0, 33], sizes = [16, 256], strides = [1, 1]} : vector<16x290xf32> to vector<16x256xf32>
    %75 = vector.broadcast %53 : vector<16x1xf32> to vector<16x256xf32>
    %76 = arith.mulf %74, %75 : vector<16x256xf32>
    %77 = arith.addf %73, %76 : vector<16x256xf32>
    %78 = vector.extract_strided_slice %37 {offsets = [0, 2], sizes = [16, 256], strides = [1, 1]} : vector<16x290xf32> to vector<16x256xf32>
    %79 = vector.broadcast %43 : vector<16x1xf32> to vector<16x256xf32>
    %80 = arith.mulf %78, %79 : vector<16x256xf32>
    %81 = vector.extract_strided_slice %37 {offsets = [0, 18], sizes = [16, 256], strides = [1, 1]} : vector<16x290xf32> to vector<16x256xf32>
    %82 = vector.broadcast %49 : vector<16x1xf32> to vector<16x256xf32>
    %83 = arith.mulf %81, %82 : vector<16x256xf32>
    %84 = arith.addf %80, %83 : vector<16x256xf32>
    %85 = vector.extract_strided_slice %37 {offsets = [0, 34], sizes = [16, 256], strides = [1, 1]} : vector<16x290xf32> to vector<16x256xf32>
    %86 = vector.broadcast %55 : vector<16x1xf32> to vector<16x256xf32>
    %87 = arith.mulf %85, %86 : vector<16x256xf32>
    %88 = arith.addf %84, %87 : vector<16x256xf32>
    %c0_i32 = arith.constant 0 : i32
    %89 = vector.broadcast %c0_i32 : i32 to vector<1x256xi32>
    %90 = arith.cmpi ne, %2, %89 : vector<1x256xi32>
    %cst_43 = arith.constant 0.000000e+00 : f32
    %91 = vector.shape_cast %90 : vector<1x256xi1> to vector<1x256xi1>
    %92 = vector.broadcast %91 : vector<1x256xi1> to vector<16x256xi1>
    %93 = vector.broadcast %cst_43 : f32 to vector<16x256xf32>
    %94 = arith.select %92, %66, %93 : vector<16x256xi1>, vector<16x256xf32>
    %95 = arith.addf %94, %77 : vector<16x256xf32>
    %c15_i32_44 = arith.constant 15 : i32
    %96 = vector.broadcast %c15_i32_44 : i32 to vector<1x256xi32>
    %97 = arith.cmpi ne, %2, %96 : vector<1x256xi32>
    %cst_45 = arith.constant 0.000000e+00 : f32
    %98 = vector.shape_cast %97 : vector<1x256xi1> to vector<1x256xi1>
    %99 = vector.broadcast %98 : vector<1x256xi1> to vector<16x256xi1>
    %100 = vector.broadcast %cst_45 : f32 to vector<16x256xf32>
    %101 = arith.select %99, %88, %100 : vector<16x256xi1>, vector<16x256xf32>
    %102 = arith.addf %95, %101 : vector<16x256xf32>
    %c0_46 = arith.constant 0 : index
    %c0_47 = arith.constant 0 : index
    %103 = vector.load %arg6[%c0_46, %c0_47] : memref<16x1xf32, #tpu.memory_space<vmem>>, vector<16x1xf32>
    %104 = vector.broadcast %103 : vector<16x1xf32> to vector<16x256xf32>
    %105 = arith.addf %102, %104 : vector<16x256xf32>
    %cst_48 = arith.constant 0.000000e+00 : f32
    %106 = vector.broadcast %cst_48 : f32 to vector<16x256xf32>
    %107 = arith.maximumf %105, %106 : vector<16x256xf32>
    %c0_49 = arith.constant 0 : index
    %c0_50 = arith.constant 0 : index
    %108 = vector.load %arg7[%c0_49, %c0_50] : memref<16x16xbf16, #tpu.memory_space<vmem>>, vector<16x16xbf16>
    %109 = arith.truncf %107 : vector<16x256xf32> to vector<16x256xbf16>
    %cst_51 = arith.constant dense<0.000000e+00> : vector<16x256xf32>
    %110 = tpu.matmul %108, %109, %cst_51 {dimension_numbers = #tpu.dot_dimension_numbers<[1], [0], [0], [1], [0, 0, 1, 1], [], []>} : vector<16x16xbf16>, vector<16x256xbf16>, vector<16x256xf32> -> vector<16x256xf32>
    %c0_52 = arith.constant 0 : index
    %c0_53 = arith.constant 0 : index
    %111 = vector.load %arg8[%c0_52, %c0_53] : memref<16x1xf32, #tpu.memory_space<vmem>>, vector<16x1xf32>
    %112 = vector.broadcast %111 : vector<16x1xf32> to vector<16x256xf32>
    %113 = arith.addf %110, %112 : vector<16x256xf32>
    %114 = arith.addf %113, %35 : vector<16x256xf32>
    %c0_54 = arith.constant 0 : index
    %c0_55 = arith.constant 0 : index
    %c0_56 = arith.constant 0 : index
    %115 = vector.load %arg9[%c0_54, %c0_55, %c0_56] : memref<1x16x256xf32, #tpu.memory_space<vmem>>, vector<1x16x256xf32>
    %116 = vector.shape_cast %115 : vector<1x16x256xf32> to vector<16x256xf32>
    %117 = vector.shape_cast %114 : vector<16x256xf32> to vector<1x16x256xf32>
    tpu.vector_store %arg9[%c0_54, %c0_55, %c0_56], %117 {strides = array<i32>} : memref<1x16x256xf32, #tpu.memory_space<vmem>>, vector<1x16x256xf32>,
    return
  }
  func.func @transform_0(%arg0: i32) -> (i32, i32) {
    %c0_i32 = arith.constant 0 : i32
    %c0_i32_0 = arith.constant 0 : i32
    %c0_i32_1 = arith.constant 0 : i32
    return %c0_i32, %c0_i32_0 : i32, i32
  }
  func.func @transform_1(%arg0: i32) -> (i32, i32, i32) {
    %c0_i32 = arith.constant 0 : i32
    %c0_i32_0 = arith.constant 0 : i32
    %c0_i32_1 = arith.constant 0 : i32
    return %arg0, %c0_i32, %c0_i32_0 : i32, i32, i32
  }
  func.func @transform_2(%arg0: i32) -> (i32, i32, i32) {
    %c0_i32 = arith.constant 0 : i32
    %c0_i32_0 = arith.constant 0 : i32
    %c0_i32_1 = arith.constant 0 : i32
    %c0_i32_2 = arith.constant 0 : i32
    return %c0_i32, %c0_i32_0, %c0_i32_1 : i32, i32, i32
  }
  func.func @transform_3(%arg0: i32) -> (i32, i32) {
    %c0_i32 = arith.constant 0 : i32
    %c0_i32_0 = arith.constant 0 : i32
    %c0_i32_1 = arith.constant 0 : i32
    return %c0_i32, %c0_i32_0 : i32, i32
  }
  func.func @transform_4(%arg0: i32) -> (i32, i32, i32) {
    %c0_i32 = arith.constant 0 : i32
    %c0_i32_0 = arith.constant 0 : i32
    %c0_i32_1 = arith.constant 0 : i32
    %c0_i32_2 = arith.constant 0 : i32
    return %c0_i32, %c0_i32_0, %c0_i32_1 : i32, i32, i32
  }
  func.func @transform_5(%arg0: i32) -> (i32, i32) {
    %c0_i32 = arith.constant 0 : i32
    %c0_i32_0 = arith.constant 0 : i32
    %c0_i32_1 = arith.constant 0 : i32
    return %c0_i32, %c0_i32_0 : i32, i32
  }
  func.func @transform_6(%arg0: i32) -> (i32, i32) {
    %c0_i32 = arith.constant 0 : i32
    %c0_i32_0 = arith.constant 0 : i32
    %c0_i32_1 = arith.constant 0 : i32
    return %c0_i32, %c0_i32_0 : i32, i32
  }
  func.func @transform_7(%arg0: i32) -> (i32, i32) {
    %c0_i32 = arith.constant 0 : i32
    %c0_i32_0 = arith.constant 0 : i32
    %c0_i32_1 = arith.constant 0 : i32
    return %c0_i32, %c0_i32_0 : i32, i32
  }
  func.func @transform_8(%arg0: i32) -> (i32, i32, i32) {
    %c0_i32 = arith.constant 0 : i32
    %c0_i32_0 = arith.constant 0 : i32
    %c0_i32_1 = arith.constant 0 : i32
    return %arg0, %c0_i32, %c0_i32_0 : i32, i32, i32
  }
}

</mosaic_0001>

<llo_original>
// kernel: a_call__.1
$region0: #{a_call__.1}
  #allocation0 [shape = 'u32[]', space=smem, size = 0x4, offset = 0x4, fixed_abs, tag = 'smem constant byte address 0x4 - core index']
  #allocation1 [shape = 'u32[72,128]{1,0:T(1,128)}', space=vmem, size = 0x9000, scoped, tag = 'internal scratch']
  %s0 = inlined_call_operand.vmem [shape: s32[1,256], index: 0, kind: input, shape index: {}]
  %s1 = inlined_call_operand.vmem [shape: bf16[2,12,256], index: 1, kind: input, shape index: {}]
  %s2 = inlined_call_operand.vmem [shape: bf16[4,16,12], index: 2, kind: input, shape index: {}]
  %s3 = inlined_call_operand.vmem [shape: f32[16,1], index: 3, kind: input, shape index: {}]
  %s4 = inlined_call_operand.vmem [shape: f32[9,16,1], index: 4, kind: input, shape index: {}]
  %s5 = inlined_call_operand.vmem [shape: f32[16,1], index: 5, kind: input, shape index: {}]
  %s6 = inlined_call_operand.vmem [shape: bf16[16,16], index: 6, kind: input, shape index: {}]
  %s7 = inlined_call_operand.vmem [shape: f32[16,1], index: 7, kind: input, shape index: {}]
  %s8 = inlined_call_operand.vmem [shape: f32[2,16,256], index: 8, kind: output, shape index: {}]
  %s9 = sld [smem:[#allocation0]]
  $region65: #{a_call__.1} parent=0
    _
  %s11 = ssub.s32 1, %s9
  %s12 = scalar_select 0, %s11, %s9
  loop: start=0, step=1, limit=4
  $region2: #{a_call__.1} parent=0 // loop_pre_header
    _
  $region3: #{a_call__.1} parent=0 // loop_header
    %s14 = sphi 0, %s18
    %p15 = scmp.ge.s32.totalorder %s14, 4
    %s22 = sphi 0, %s22
    %s24 = sphi 0, %s22
    %s25 = sphi 0, %s24
    %s39 = sphi 0, %s25
    %s45 = sphi 0, %s47
    %s48 = sphi 0, %s45
    %s49 = sphi 0, %s48
    %s65 = sphi 0, %s49
    %s69 = sphi 0, %s69
    %s71 = sphi 0, %s69
    %s72 = sphi 0, %s71
    %s86 = sphi 0, %s72
    %s90 = sphi 0, %s90
    %s92 = sphi 0, %s90
    %s93 = sphi 0, %s92
    %s107 = sphi 0, %s93
    %s111 = sphi 0, %s111
    %s113 = sphi 0, %s111
    %s114 = sphi 0, %s113
    %s128 = sphi 0, %s114
    %s132 = sphi 0, %s132
    %s134 = sphi 0, %s132
    %s135 = sphi 0, %s134
    %s149 = sphi 0, %s135
    %s153 = sphi 0, %s153
    %s155 = sphi 0, %s153
    %s156 = sphi 0, %s155
    %s170 = sphi 0, %s156
    %s174 = sphi 0, %s174
    %s176 = sphi 0, %s174
    %s177 = sphi 0, %s176
    %s191 = sphi 0, %s177
    %s197 = sphi 0, %s199
    %s200 = sphi 0, %s197
    %s201 = sphi 0, %s200
    %s217 = sphi 0, %s201
  $region4: #{a_call__.1} parent=0 // loop_header_branch
    %17 = sbr.rel (%p15) target = $region8
  $region5: #{a_call__.1} parent=0 // loop_body
    %s19 = ssub.s32 %s14, 1
    %s20 = ssub.s32 %s14, 2
    %s21 = sadd.s32 %s14, 1
    %s23 = sadd.s32 %s22, 1
    %p26 = scmp.eq.s32.totalorder %s14, 1
    %p27 = scmp.ne.s32.totalorder %s22, %s24
    %p28 = scmp.eq.s32.totalorder %s14, 0
    %p29 = por %p27, %p28
    %p30 = scmp.ne.s32.totalorder %s22, %s24
    %p31 = scmp.eq.s32.totalorder %s19, 1
    %p32 = por %p30, %p31
    %p33 = scmp.ne.s32.totalorder %s24, %s25
    %p34 = scmp.eq.s32.totalorder %s19, 0
    %p35 = por %p33, %p34
    %p36 = scmp.ne.s32.totalorder %s24, %s25
    %p37 = scmp.eq.s32.totalorder %s20, 1
    %p38 = por %p36, %p37
    %p40 = scmp.ne.s32.totalorder %s25, %s39
    %p41 = scmp.eq.s32.totalorder %s20, 0
    %p42 = por %p40, %p41
    %s43 = ssub.s32 %s14, %s21
    %p44 = scmp.eq.s32.totalorder %s43, 0
    %s46 = sadd.s32 %s45, 1
    %s47 = scalar_select %p44, %s45, %s46
    %p50 = pneg %p44
    %p51 = scmp.eq.s32.totalorder %s14, 1
    %p52 = por %p50, %p51
    %p53 = scmp.ne.s32.totalorder %s45, %s48
    %p54 = scmp.eq.s32.totalorder %s14, 0
    %p55 = por %p53, %p54
    %p56 = scmp.ne.s32.totalorder %s45, %s48
    %p57 = scmp.eq.s32.totalorder %s19, 1
    %p58 = por %p56, %p57
    %p59 = scmp.ne.s32.totalorder %s48, %s49
    %p60 = scmp.eq.s32.totalorder %s19, 0
    %p61 = por %p59, %p60
    %p62 = scmp.ne.s32.totalorder %s48, %s49
    %p63 = scmp.eq.s32.totalorder %s20, 1
    %p64 = por %p62, %p63
    %p66 = scmp.ne.s32.totalorder %s49, %s65
    %p67 = scmp.eq.s32.totalorder %s20, 0
    %p68 = por %p66, %p67
    %s70 = sadd.s32 %s69, 1
    %p73 = scmp.eq.s32.totalorder %s14, 1
    %p74 = scmp.ne.s32.totalorder %s69, %s71
    %p75 = scmp.eq.s32.totalorder %s14, 0
    %p76 = por %p74, %p75
    %p77 = scmp.ne.s32.totalorder %s69, %s71
    %p78 = scmp.eq.s32.totalorder %s19, 1
    %p79 = por %p77, %p78
    %p80 = scmp.ne.s32.totalorder %s71, %s72
    %p81 = scmp.eq.s32.totalorder %s19, 0
    %p82 = por %p80, %p81
    %p83 = scmp.ne.s32.totalorder %s71, %s72
    %p84 = scmp.eq.s32.totalorder %s20, 1
    %p85 = por %p83, %p84
    %p87 = scmp.ne.s32.totalorder %s72, %s86
    %p88 = scmp.eq.s32.totalorder %s20, 0
    %p89 = por %p87, %p88
    %s91 = sadd.s32 %s90, 1
    %p94 = scmp.eq.s32.totalorder %s14, 1
    %p95 = scmp.ne.s32.totalorder %s90, %s92
    %p96 = scmp.eq.s32.totalorder %s14, 0
    %p97 = por %p95, %p96
    %p98 = scmp.ne.s32.totalorder %s90, %s92
    %p99 = scmp.eq.s32.totalorder %s19, 1
    %p100 = por %p98, %p99
    %p101 = scmp.ne.s32.totalorder %s92, %s93
    %p102 = scmp.eq.s32.totalorder %s19, 0
    %p103 = por %p101, %p102
    %p104 = scmp.ne.s32.totalorder %s92, %s93
    %p105 = scmp.eq.s32.totalorder %s20, 1
    %p106 = por %p104, %p105
    %p108 = scmp.ne.s32.totalorder %s93, %s107
    %p109 = scmp.eq.s32.totalorder %s20, 0
    %p110 = por %p108, %p109
    %s112 = sadd.s32 %s111, 1
    %p115 = scmp.eq.s32.totalorder %s14, 1
    %p116 = scmp.ne.s32.totalorder %s111, %s113
    %p117 = scmp.eq.s32.totalorder %s14, 0
    %p118 = por %p116, %p117
    %p119 = scmp.ne.s32.totalorder %s111, %s113
    %p120 = scmp.eq.s32.totalorder %s19, 1
    %p121 = por %p119, %p120
    %p122 = scmp.ne.s32.totalorder %s113, %s114
    %p123 = scmp.eq.s32.totalorder %s19, 0
    %p124 = por %p122, %p123
    %p125 = scmp.ne.s32.totalorder %s113, %s114
    %p126 = scmp.eq.s32.totalorder %s20, 1
    %p127 = por %p125, %p126
    %p129 = scmp.ne.s32.totalorder %s114, %s128
    %p130 = scmp.eq.s32.totalorder %s20, 0
    %p131 = por %p129, %p130
    %s133 = sadd.s32 %s132, 1
    %p136 = scmp.eq.s32.totalorder %s14, 1
    %p137 = scmp.ne.s32.totalorder %s132, %s134
    %p138 = scmp.eq.s32.totalorder %s14, 0
    %p139 = por %p137, %p138
    %p140 = scmp.ne.s32.totalorder %s132, %s134
    %p141 = scmp.eq.s32.totalorder %s19, 1
    %p142 = por %p140, %p141
    %p143 = scmp.ne.s32.totalorder %s134, %s135
    %p144 = scmp.eq.s32.totalorder %s19, 0
    %p145 = por %p143, %p144
    %p146 = scmp.ne.s32.totalorder %s134, %s135
    %p147 = scmp.eq.s32.totalorder %s20, 1
    %p148 = por %p146, %p147
    %p150 = scmp.ne.s32.totalorder %s135, %s149
    %p151 = scmp.eq.s32.totalorder %s20, 0
    %p152 = por %p150, %p151
    %s154 = sadd.s32 %s153, 1
    %p157 = scmp.eq.s32.totalorder %s14, 1
    %p158 = scmp.ne.s32.totalorder %s153, %s155
    %p159 = scmp.eq.s32.totalorder %s14, 0
    %p160 = por %p158, %p159
    %p161 = scmp.ne.s32.totalorder %s153, %s155
    %p162 = scmp.eq.s32.totalorder %s19, 1
    %p163 = por %p161, %p162
    %p164 = scmp.ne.s32.totalorder %s155, %s156
    %p165 = scmp.eq.s32.totalorder %s19, 0
    %p166 = por %p164, %p165
    %p167 = scmp.ne.s32.totalorder %s155, %s156
    %p168 = scmp.eq.s32.totalorder %s20, 1
    %p169 = por %p167, %p168
    %p171 = scmp.ne.s32.totalorder %s156, %s170
    %p172 = scmp.eq.s32.totalorder %s20, 0
    %p173 = por %p171, %p172
    %s175 = sadd.s32 %s174, 1
    %p178 = scmp.eq.s32.totalorder %s14, 1
    %p179 = scmp.ne.s32.totalorder %s174, %s176
    %p180 = scmp.eq.s32.totalorder %s14, 0
    %p181 = por %p179, %p180
    %p182 = scmp.ne.s32.totalorder %s174, %s176
    %p183 = scmp.eq.s32.totalorder %s19, 1
    %p184 = por %p182, %p183
    %p185 = scmp.ne.s32.totalorder %s176, %s177
    %p186 = scmp.eq.s32.totalorder %s19, 0
    %p187 = por %p185, %p186
    %p188 = scmp.ne.s32.totalorder %s176, %s177
    %p189 = scmp.eq.s32.totalorder %s20, 1
    %p190 = por %p188, %p189
    %p192 = scmp.ne.s32.totalorder %s177, %s191
    %p193 = scmp.eq.s32.totalorder %s20, 0
    %p194 = por %p192, %p193
    %s195 = ssub.s32 %s14, %s21
    %p196 = scmp.eq.s32.totalorder %s195, 0
    %s198 = sadd.s32 %s197, 1
    %s199 = scalar_select %p196, %s197, %s198
    %p202 = pneg %p196
    %p203 = scmp.eq.s32.totalorder %s14, 1
    %p204 = por %p202, %p203
    %p205 = scmp.ne.s32.totalorder %s197, %s200
    %p206 = scmp.eq.s32.totalorder %s14, 0
    %p207 = por %p205, %p206
    %p208 = scmp.ne.s32.totalorder %s197, %s200
    %p209 = scmp.eq.s32.totalorder %s19, 1
    %p210 = por %p208, %p209
    %p211 = scmp.ne.s32.totalorder %s200, %s201
    %p212 = scmp.eq.s32.totalorder %s19, 0
    %p213 = por %p211, %p212
    %p214 = scmp.ne.s32.totalorder %s200, %s201
    %p215 = scmp.eq.s32.totalorder %s20, 1
    %p216 = por %p214, %p215
    %p218 = scmp.ne.s32.totalorder %s201, %s217
    %p219 = scmp.eq.s32.totalorder %s20, 0
    %p220 = por %p218, %p219
    %p221 = scmp.le.s32.totalorder 1, %s14
    %p222 = scmp.lt.s32.totalorder %s14, 3
    %p223 = pnand %p221, %p222
    %p224 = pneg %p223
    // Predicated region
    $region9: #{a_call__.1} parent=5 // pred_check
      _
    $region10: #{a_call__.1} parent=5 // pred_check_branch
      %226 = sbr.rel (%p223) target = $region12
    $region11: #{a_call__.1} parent=5 // pred_region
      %s227 = ssub.s32 %s14, 1
      // Predicated region
      $region13: #{a_call__.1} parent=11 // pred_check
        %p228 = pneg %p35
      $region14: #{a_call__.1} parent=11 // pred_check_branch
        %230 = sbr.rel (%p228) target = $region16
      $region15: #{a_call__.1} parent=11 // pred_region
        _
      $region16: #{a_call__.1} parent=11 // pred_fallthru
        _
      // Predicated region
      $region17: #{a_call__.1} parent=11 // pred_check
        %p231 = pneg %p82
      $region18: #{a_call__.1} parent=11 // pred_check_branch
        %233 = sbr.rel (%p231) target = $region20
      $region19: #{a_call__.1} parent=11 // pred_region
        _
      $region20: #{a_call__.1} parent=11 // pred_fallthru
        _
      // Predicated region
      $region21: #{a_call__.1} parent=11 // pred_check
        %p234 = pneg %p103
      $region22: #{a_call__.1} parent=11 // pred_check_branch
        %236 = sbr.rel (%p234) target = $region24
      $region23: #{a_call__.1} parent=11 // pred_region
        _
      $region24: #{a_call__.1} parent=11 // pred_fallthru
        _
      // Predicated region
      $region25: #{a_call__.1} parent=11 // pred_check
        %p237 = pneg %p124
      $region26: #{a_call__.1} parent=11 // pred_check_branch
        %239 = sbr.rel (%p237) target = $region28
      $region27: #{a_call__.1} parent=11 // pred_region
        _
      $region28: #{a_call__.1} parent=11 // pred_fallthru
        _
      // Predicated region
      $region29: #{a_call__.1} parent=11 // pred_check
        %p240 = pneg %p145
      $region30: #{a_call__.1} parent=11 // pred_check_branch
        %242 = sbr.rel (%p240) target = $region32
      $region31: #{a_call__.1} parent=11 // pred_region
        _
      $region32: #{a_call__.1} parent=11 // pred_fallthru
        _
      // Predicated region
      $region33: #{a_call__.1} parent=11 // pred_check
        %p243 = pneg %p166
      $region34: #{a_call__.1} parent=11 // pred_check_branch
        %245 = sbr.rel (%p243) target = $region36
      $region35: #{a_call__.1} parent=11 // pred_region
        _
      $region36: #{a_call__.1} parent=11 // pred_fallthru
        _
      // Predicated region
      $region37: #{a_call__.1} parent=11 // pred_check
        %p246 = pneg %p187
      $region38: #{a_call__.1} parent=11 // pred_check_branch
        %248 = sbr.rel (%p246) target = $region40
      $region39: #{a_call__.1} parent=11 // pred_region
        _
      $region40: #{a_call__.1} parent=11 // pred_fallthru
        _
    $region12: #{a_call__.1} parent=5 // pred_fallthru
      _
    %p249 = scmp.lt.s32.totalorder %s14, 2
    // Predicated region
    $region41: #{a_call__.1} parent=5 // pred_check
      %p250 = pneg %p249
    $region42: #{a_call__.1} parent=5 // pred_check_branch
      %252 = sbr.rel (%p250) target = $region44
    $region43: #{a_call__.1} parent=5 // pred_region
      // Predicated region
      $region45: #{a_call__.1} parent=43 // pred_check
        %p253 = pneg %p55
      $region46: #{a_call__.1} parent=43 // pred_check_branch
        %255 = sbr.rel (%p253) target = $region48
      $region47: #{a_call__.1} parent=43 // pred_region
        %p256 = scmp.lt.s32.totalorder %s14, 1
        %s257 = scalar_select %p256, %s14, 1
        %s258 = smul.addr %s257, 4
        %s259 = smul.addr %s258, 4
        %s260 = scalar_lea.vmem %s1, %s259
      $region48: #{a_call__.1} parent=43 // pred_fallthru
        _
    $region44: #{a_call__.1} parent=5 // pred_fallthru
      _
    %p261 = scmp.le.s32.totalorder 1, %s14
    %p262 = scmp.lt.s32.totalorder %s14, 3
    %p263 = pnand %p261, %p262
    %p264 = pneg %p263
    // Predicated region
    $region49: #{a_call__.1} parent=5 // pred_check
      _
    $region50: #{a_call__.1} parent=5 // pred_check_branch
      %266 = sbr.rel (%p263) target = $region52
    $region51: #{a_call__.1} parent=5 // pred_region
      %s267 = ssub.s32 %s14, 1
      %p268 = pneg %p35
      %p269 = pneg %p32
      %p270 = scmp.lt.s32.totalorder %s19, 1
      %s271 = scalar_select %p270, %s19, 1
      %s272 = smul.addr %s271, 4
      %s273 = smul.addr %s272, 4
      %s274 = scalar_lea.vmem %s1, %s273
      %p275 = pneg %p61
      %p276 = pneg %p58
      %p277 = pneg %p82
      %p278 = pneg %p79
      %p279 = pneg %p103
      %p280 = pneg %p100
      %p281 = pneg %p124
      %p282 = pneg %p121
      %p283 = pneg %p145
      %p284 = pneg %p142
      %p285 = pneg %p166
      %p286 = pneg %p163
      %p287 = pneg %p187
      %p288 = pneg %p184
      %p289 = pneg %p213
      %p290 = pneg %p210
      %p291 = scmp.lt.s32.totalorder %s19, 1
      %s292 = scalar_select %p291, %s19, 1
      %s293 = smul.addr %s292, 4
      %s294 = smul.addr %s293, 8
      %s295 = scalar_lea.vmem %s8, %s294
      %p296 = scmp.lt.s32.totalorder %s19, 1
      %s297 = scalar_select %p296, %s19, 1
      %s298 = smul.addr %s297, 4
      %s299 = smul.addr %s298, 4
      %s300 = scalar_lea.vmem %s1, %s299
      %p301 = scmp.lt.s32.totalorder %s19, 1
      %s302 = scalar_select %p301, %s19, 1
      %s303 = smul.addr %s302, 4
      %s304 = smul.addr %s303, 8
      %s305 = scalar_lea.vmem %s8, %s304
      %v307 = vld [vmem:[%s300] sm:$0xff]
      %v308 = vld [vmem:[%s300 + $0x8] sm:$0x33]
      %v309 = vld [vmem:[%s0] sm:$0x3]
      %vm310 = vcmp.ne.s32.totalorder %v309, 15
      %v311 = vsel %vm310, 1, 0
      %v312 = vcvt.s32.f32 %v311
      %v314 = vperm.slane %v312, 0
      %v315 = vperm.slane %v312, 1
      %v318 = vpack.c.bf16 %v315, %v314
      %v320 = vunpack.c.l.b16 %v318
      %v321 = vunpack.c.h.b16 %v318
      %v322 = vpack.c.b16 %v320, %v320
      %v323 = vpack.c.b16 %v321, %v321
      %v325 = vpack.i.b16 %v322, %v322
      %v327 = vperm.slane %v325, 0
      %v329 = vpack.i.b16 %v323, %v323
      %v331 = vperm.slane %v329, 0
      %v332 = vunpack.c.l.bf16 %v307
      %v333 = vunpack.c.h.bf16 %v307
      %v334 = vunpack.c.l.bf16 %v308
      %v335 = vunpack.c.h.bf16 %v308
      %v336 = vunpack.c.l.bf16 %v327
      %v337 = vunpack.c.l.bf16 %v331
      %v338 = vmul.f32 %v332, %v336
      %v339 = vmul.f32 %v333, %v337
      %v340 = vmul.f32 %v334, %v336
      %v341 = vmul.f32 %v335, %v337
      %v342 = vpack.c.bf16 %v339, %v338
      %v343 = vpack.c.bf16 %v341, %v340
      %v346 = vunpack.c.l.b16 %v307
      %v347 = vunpack.c.h.b16 %v307
      %v348 = vunpack.c.l.b16 %v308
      %v349 = vunpack.c.h.b16 %v308
      %v350 = vpack.c.b16 %v348, %v346
      %v351 = vpack.c.b16 %v349, %v347
      %352 = vrot.lane.b32.xlu0 %v350, 17
      %v353 = vpop.permute.xlu0 %352
      %354 = vrot.lane.b32.xlu0 %v351, 17
      %v355 = vpop.permute.xlu0 %354
      %vm356 = vcmask 138240
      %v357 = vsel %vm356, %v353, %v355
      %vm358 = vcmask 138240
      %v361 = vsel %vm358, 0, %v353
      %v364 = vunpack.c.l.b16 %v342
      %v365 = vunpack.c.h.b16 %v342
      %v366 = vunpack.c.l.b16 %v343
      %v367 = vunpack.c.h.b16 %v343
      %v368 = vpack.c.b16 %v366, %v364
      %v369 = vpack.c.b16 %v367, %v365
      %370 = vrot.lane.b32.xlu0 %v368, 17
      %v371 = vpop.permute.xlu0 %370
      %372 = vrot.lane.b32.xlu0 %v369, 17
      %v373 = vpop.permute.xlu0 %372
      %v374 = vsel %vm356, %v371, %v373
      %v376 = vsel %vm358, 0, %v371
      %v377 = vld [vmem:[%s2] sm:$0xf]
      %v378 = vld [vmem:[%s2 + $0x4] sm:$0xf]
      %s379 = scalar_lea.vmem %s2, 8
      %v380 = vld [vmem:[%s379] sm:$0xf]
      %v381 = vld [vmem:[%s379 + $0x4] sm:$0xf]
      %v384 = vunpack.c.l.b16 %v380
      %v385 = vunpack.c.l.b16 %v381
      %v386 = vpack.c.b16 %v385, %v384
      %388 = vrot.lane.b32.xlu0 %v361, 127
      %v389 = vpop.permute.xlu0 %388
      %390 = vrot.lane.b32.xlu0 %v357, 127
      %v391 = vpop.permute.xlu0 %390
      %392 = vrot.lane.b32.xlu0 %v355, 127
      %v393 = vpop.permute.xlu0 %392
      %vm394 = vcmask 1039360
      %v395 = vsel %vm394, %v389, %v391
      %v396 = vsel %vm394, %v391, %v393
      %vm397 = vcmask 97280
      %v399 = vsel %vm397, %v386, 0
      %vm401 = vcmask 1045504
      %v403 = vsel %vm401, %v395, 0
      %v406 = vsel %vm401, %v396, 0
      %408 = vmatpush.bf16.msra.mxu0 0
      %409 = vmatpush.bf16.msra.mxu0 0
      %410 = vmatpush.bf16.msra.mxu0 0
      %411 = vmatpush.bf16.msra.mxu0 0
      %412 = vmatpush.bf16.msra.mxu0 0
      %413 = vmatpush.bf16.msra.mxu0 0
      %414 = vmatpush.bf16.msra.mxu0 0
      %415 = vmatpush.bf16.msra.mxu0 %v403
      %416 = vmatmul.bf16.gmra.mxu0 %v399
      %v417 = vpop.f32.mrf.mxu0
      %v418 = vadd.f32 0.0, %v417
      %v419 = vpop.f32.mrf.mxu0
      %v420 = vadd.f32 0.0, %v419
      %421 = vdwg.mxu0
      %422 = vmatpush.bf16.msra.mxu0 0
      %423 = vmatpush.bf16.msra.mxu0 0
      %424 = vmatpush.bf16.msra.mxu0 0
      %425 = vmatpush.bf16.msra.mxu0 0
      %426 = vmatpush.bf16.msra.mxu0 0
      %427 = vmatpush.bf16.msra.mxu0 0
      %428 = vmatpush.bf16.msra.mxu0 0
      %429 = vmatpush.bf16.msra.mxu0 %v406
      %430 = vmatmul.bf16.gmra.mxu0 %v399
      %v431 = vpop.f32.mrf.mxu0
      %v432 = vadd.f32 0.0, %v431
      %v433 = vpop.f32.mrf.mxu0
      %v434 = vadd.f32 0.0, %v433
      %435 = vdwg.mxu0
      %v438 = vunpack.c.l.b16 %v377
      %v439 = vunpack.c.l.b16 %v378
      %v440 = vpack.c.b16 %v439, %v438
      %v442 = vsel %vm397, %v440, 0
      %v444 = vsel %vm401, %v376, 0
      %v447 = vsel %vm401, %v374, 0
      %449 = vmatpush.bf16.msra.mxu0 0
      %450 = vmatpush.bf16.msra.mxu0 0
      %451 = vmatpush.bf16.msra.mxu0 0
      %452 = vmatpush.bf16.msra.mxu0 0
      %453 = vmatpush.bf16.msra.mxu0 0
      %454 = vmatpush.bf16.msra.mxu0 0
      %455 = vmatpush.bf16.msra.mxu0 0
      %456 = vmatpush.bf16.msra.mxu0 %v444
      %457 = vmatmul.bf16.gmra.mxu0 %v442
      %v458 = vpop.f32.mrf.mxu0
      %v459 = vadd.f32 %v418, %v458
      %v460 = vpop.f32.mrf.mxu0
      %v461 = vadd.f32 %v420, %v460
      %462 = vdwg.mxu0
      %463 = vmatpush.bf16.msra.mxu0 0
      %464 = vmatpush.bf16.msra.mxu0 0
      %465 = vmatpush.bf16.msra.mxu0 0
      %466 = vmatpush.bf16.msra.mxu0 0
      %467 = vmatpush.bf16.msra.mxu0 0
      %468 = vmatpush.bf16.msra.mxu0 0
      %469 = vmatpush.bf16.msra.mxu0 0
      %470 = vmatpush.bf16.msra.mxu0 %v447
      %471 = vmatmul.bf16.gmra.mxu0 %v442
      %v472 = vpop.f32.mrf.mxu0
      %v473 = vadd.f32 %v432, %v472
      %v474 = vpop.f32.mrf.mxu0
      %v475 = vadd.f32 %v434, %v474
      %476 = vdwg.mxu0
      %s477 = scalar_lea.vmem %s2, 16
      %v478 = vld [vmem:[%s477] sm:$0xf]
      %v479 = vld [vmem:[%s477 + $0x4] sm:$0xf]
      %v482 = vunpack.c.l.b16 %v478
      %v483 = vunpack.c.l.b16 %v479
      %v484 = vpack.c.b16 %v483, %v482
      %486 = vrot.lane.b32.xlu0 %v376, 112
      %v487 = vpop.permute.xlu0 %486
      %488 = vrot.lane.b32.xlu0 %v374, 112
      %v489 = vpop.permute.xlu0 %488
      %490 = vrot.lane.b32.xlu0 %v373, 112
      %v491 = vpop.permute.xlu0 %490
      %vm492 = vcmask 916480
      %v493 = vsel %vm492, %v487, %v489
      %v494 = vsel %vm492, %v489, %v491
      %v496 = vsel %vm397, %v484, 0
      %v499 = vsel %vm401, %v493, 0
      %v502 = vsel %vm401, %v494, 0
      %504 = vmatpush.bf16.msra.mxu0 0
      %505 = vmatpush.bf16.msra.mxu0 0
      %506 = vmatpush.bf16.msra.mxu0 0
      %507 = vmatpush.bf16.msra.mxu0 0
      %508 = vmatpush.bf16.msra.mxu0 0
      %509 = vmatpush.bf16.msra.mxu0 0
      %510 = vmatpush.bf16.msra.mxu0 0
      %511 = vmatpush.bf16.msra.mxu0 %v499
      %512 = vmatmul.bf16.gmra.mxu0 %v496
      %v513 = vpop.f32.mrf.mxu0
      %v514 = vadd.f32 0.0, %v513
      %v515 = vpop.f32.mrf.mxu0
      %v516 = vadd.f32 0.0, %v515
      %517 = vdwg.mxu0
      %518 = vmatpush.bf16.msra.mxu0 0
      %519 = vmatpush.bf16.msra.mxu0 0
      %520 = vmatpush.bf16.msra.mxu0 0
      %521 = vmatpush.bf16.msra.mxu0 0
      %522 = vmatpush.bf16.msra.mxu0 0
      %523 = vmatpush.bf16.msra.mxu0 0
      %524 = vmatpush.bf16.msra.mxu0 0
      %525 = vmatpush.bf16.msra.mxu0 %v502
      %526 = vmatmul.bf16.gmra.mxu0 %v496
      %v527 = vpop.f32.mrf.mxu0
      %v528 = vadd.f32 0.0, %v527
      %v529 = vpop.f32.mrf.mxu0
      %v530 = vadd.f32 0.0, %v529
      %531 = vdwg.mxu0
      %v532 = vadd.f32 %v459, %v514
      %v533 = vadd.f32 %v473, %v528
      %v534 = vadd.f32 %v461, %v516
      %v535 = vadd.f32 %v475, %v530
      %s536 = scalar_lea.vmem %s2, 24
      %v537 = vld [vmem:[%s536] sm:$0xf]
      %v538 = vld [vmem:[%s536 + $0x4] sm:$0xf]
      %v541 = vunpack.c.l.b16 %v537
      %v542 = vunpack.c.l.b16 %v538
      %v543 = vpack.c.b16 %v542, %v541
      %v545 = vsel %vm397, %v543, 0
      %v548 = vsel %vm401, %v350, 0
      %v551 = vsel %vm401, %v351, 0
      %553 = vmatpush.bf16.msra.mxu0 0
      %554 = vmatpush.bf16.msra.mxu0 0
      %555 = vmatpush.bf16.msra.mxu0 0
      %556 = vmatpush.bf16.msra.mxu0 0
      %557 = vmatpush.bf16.msra.mxu0 0
      %558 = vmatpush.bf16.msra.mxu0 0
      %559 = vmatpush.bf16.msra.mxu0 0
      %560 = vmatpush.bf16.msra.mxu0 %v548
      %561 = vmatmul.bf16.gmra.mxu0 %v545
      %v562 = vpop.f32.mrf.mxu0
      %v563 = vadd.f32 0.0, %v562
      %v564 = vpop.f32.mrf.mxu0
      %v565 = vadd.f32 0.0, %v564
      %566 = vdwg.mxu0
      %567 = vmatpush.bf16.msra.mxu0 0
      %568 = vmatpush.bf16.msra.mxu0 0
      %569 = vmatpush.bf16.msra.mxu0 0
      %570 = vmatpush.bf16.msra.mxu0 0
      %571 = vmatpush.bf16.msra.mxu0 0
      %572 = vmatpush.bf16.msra.mxu0 0
      %573 = vmatpush.bf16.msra.mxu0 0
      %574 = vmatpush.bf16.msra.mxu0 %v551
      %575 = vmatmul.bf16.gmra.mxu0 %v545
      %v576 = vpop.f32.mrf.mxu0
      %v577 = vadd.f32 0.0, %v576
      %v578 = vpop.f32.mrf.mxu0
      %v579 = vadd.f32 0.0, %v578
      %580 = vdwg.mxu0
      %v581 = vadd.f32 %v532, %v563
      %v582 = vadd.f32 %v533, %v577
      %v583 = vadd.f32 %v534, %v565
      %v584 = vadd.f32 %v535, %v579
      %v585 = vld [vmem:[%s3] sm:$0xff]
      %v586 = vld [vmem:[%s3 + $0x8] sm:$0xff]
      %588 = vset.pattern.permute.xlu0 0
      %589 = vperm.xlu0 %588, %v585
      %v590 = vpop.permute.xlu0 %589
      %593 = vset.pattern.permute.xlu0 0
      %594 = vperm.xlu0 %593, %v586
      %v595 = vpop.permute.xlu0 %594
      %v597 = vadd.f32 %v581, %v590
      %v598 = vadd.f32 %v582, %v590
      %v599 = vadd.f32 %v583, %v595
      %v600 = vadd.f32 %v584, %v595
      %v601 = vmax.f32 %v597, 0.0
      %v602 = vmax.f32 %v598, 0.0
      %v603 = vmax.f32 %v599, 0.0
      %v604 = vmax.f32 %v600, 0.0
      %609 = vrot.lane.b32.xlu0 %v601, 17
      %v610 = vpop.permute.xlu0 %609
      %611 = vrot.lane.b32.xlu0 %v602, 17
      %v612 = vpop.permute.xlu0 %611
      %613 = vrot.lane.b32.xlu0 %v603, 17
      %v614 = vpop.permute.xlu0 %613
      %615 = vrot.lane.b32.xlu0 %v604, 17
      %v616 = vpop.permute.xlu0 %615
      %v617 = vsel %vm358, %v610, %v612
      %v618 = vsel %vm358, %v614, %v616
      %v625 = vsel %vm358, 0.0, %v610
      %v626 = vsel %vm358, 0.0, %v614
      %v627 = vsel %vm358, %v612, 0.0
      %v628 = vsel %vm358, %v616, 0.0
      %v629 = vld [vmem:[%s4] sm:$0xff]
      %v630 = vld [vmem:[%s4 + $0x8] sm:$0xff]
      %s631 = scalar_lea.vmem %s4, 16
      %v632 = vld [vmem:[%s631] sm:$0xff]
      %v633 = vld [vmem:[%s631 + $0x8] sm:$0xff]
      %s634 = scalar_lea.vmem %s4, 32
      %v635 = vld [vmem:[%s634] sm:$0xff]
      %v636 = vld [vmem:[%s634 + $0x8] sm:$0xff]
      %s637 = scalar_lea.vmem %s4, 48
      %v638 = vld [vmem:[%s637] sm:$0xff]
      %v639 = vld [vmem:[%s637 + $0x8] sm:$0xff]
      %s640 = scalar_lea.vmem %s4, 64
      %v641 = vld [vmem:[%s640] sm:$0xff]
      %v642 = vld [vmem:[%s640 + $0x8] sm:$0xff]
      %s643 = scalar_lea.vmem %s4, 80
      %v644 = vld [vmem:[%s643] sm:$0xff]
      %v645 = vld [vmem:[%s643 + $0x8] sm:$0xff]
      %s646 = scalar_lea.vmem %s4, 96
      %v647 = vld [vmem:[%s646] sm:$0xff]
      %v648 = vld [vmem:[%s646 + $0x8] sm:$0xff]
      %s649 = scalar_lea.vmem %s4, 112
      %v650 = vld [vmem:[%s649] sm:$0xff]
      %v651 = vld [vmem:[%s649 + $0x8] sm:$0xff]
      %s652 = scalar_lea.vmem %s4, 128
      %v653 = vld [vmem:[%s652] sm:$0xff]
      %v654 = vld [vmem:[%s652 + $0x8] sm:$0xff]
      %656 = vset.pattern.permute.xlu0 0
      %657 = vperm.xlu0 %656, %v629
      %v658 = vpop.permute.xlu0 %657
      %661 = vset.pattern.permute.xlu0 0
      %662 = vperm.xlu0 %661, %v630
      %v663 = vpop.permute.xlu0 %662
      %v665 = vmul.f32 %v625, %v658
      %v666 = vmul.f32 %v617, %v658
      %v667 = vmul.f32 %v626, %v663
      %v668 = vmul.f32 %v618, %v663
      %670 = vset.pattern.permute.xlu0 0
      %671 = vperm.xlu0 %670, %v638
      %v672 = vpop.permute.xlu0 %671
      %675 = vset.pattern.permute.xlu0 0
      %676 = vperm.xlu0 %675, %v639
      %v677 = vpop.permute.xlu0 %676
      %v679 = vmul.f32 %v625, %v672
      %v680 = vmul.f32 %v617, %v672
      %v681 = vmul.f32 %v627, %v672
      %v682 = vmul.f32 %v626, %v677
      %v683 = vmul.f32 %v618, %v677
      %v684 = vmul.f32 %v628, %v677
      %691 = vrot.lane.b32.xlu0 %v679, 112
      %v692 = vpop.permute.xlu0 %691
      %693 = vrot.lane.b32.xlu0 %v680, 112
      %v694 = vpop.permute.xlu0 %693
      %695 = vrot.lane.b32.xlu0 %v681, 112
      %v696 = vpop.permute.xlu0 %695
      %697 = vrot.lane.b32.xlu0 %v682, 112
      %v698 = vpop.permute.xlu0 %697
      %699 = vrot.lane.b32.xlu0 %v683, 112
      %v700 = vpop.permute.xlu0 %699
      %701 = vrot.lane.b32.xlu0 %v684, 112
      %v702 = vpop.permute.xlu0 %701
      %vm703 = vcmask 916480
      %v704 = vsel %vm703, %v692, %v694
      %v705 = vsel %vm703, %v694, %v696
      %v706 = vsel %vm703, %v698, %v700
      %v707 = vsel %vm703, %v700, %v702
      %v712 = vadd.f32 %v665, %v704
      %v713 = vadd.f32 %v666, %v705
      %v714 = vadd.f32 %v667, %v706
      %v715 = vadd.f32 %v668, %v707
      %717 = vset.pattern.permute.xlu0 0
      %718 = vperm.xlu0 %717, %v647
      %v719 = vpop.permute.xlu0 %718
      %722 = vset.pattern.permute.xlu0 0
      %723 = vperm.xlu0 %722, %v648
      %v724 = vpop.permute.xlu0 %723
      %v726 = vmul.f32 %v625, %v719
      %v727 = vmul.f32 %v617, %v719
      %v728 = vmul.f32 %v627, %v719
      %v729 = vmul.f32 %v626, %v724
      %v730 = vmul.f32 %v618, %v724
      %v731 = vmul.f32 %v628, %v724
      %738 = vrot.lane.b32.xlu0 %v726, 96
      %v739 = vpop.permute.xlu0 %738
      %740 = vrot.lane.b32.xlu0 %v727, 96
      %v741 = vpop.permute.xlu0 %740
      %742 = vrot.lane.b32.xlu0 %v728, 96
      %v743 = vpop.permute.xlu0 %742
      %744 = vrot.lane.b32.xlu0 %v729, 96
      %v745 = vpop.permute.xlu0 %744
      %746 = vrot.lane.b32.xlu0 %v730, 96
      %v747 = vpop.permute.xlu0 %746
      %748 = vrot.lane.b32.xlu0 %v731, 96
      %v749 = vpop.permute.xlu0 %748
      %vm750 = vcmask 785408
      %v751 = vsel %vm750, %v739, %v741
      %v752 = vsel %vm750, %v741, %v743
      %v753 = vsel %vm750, %v745, %v747
      %v754 = vsel %vm750, %v747, %v749
      %v759 = vadd.f32 %v712, %v751
      %v760 = vadd.f32 %v713, %v752
      %v761 = vadd.f32 %v714, %v753
      %v762 = vadd.f32 %v715, %v754
      %764 = vset.pattern.permute.xlu0 0
      %765 = vperm.xlu0 %764, %v632
      %v766 = vpop.permute.xlu0 %765
      %769 = vset.pattern.permute.xlu0 0
      %770 = vperm.xlu0 %769, %v633
      %v771 = vpop.permute.xlu0 %770
      %v773 = vmul.f32 %v625, %v766
      %v774 = vmul.f32 %v617, %v766
      %v775 = vmul.f32 %v627, %v766
      %v776 = vmul.f32 %v626, %v771
      %v777 = vmul.f32 %v618, %v771
      %v778 = vmul.f32 %v628, %v771
      %780 = vset.pattern.permute.xlu0 0
      %781 = vperm.xlu0 %780, %v641
      %v782 = vpop.permute.xlu0 %781
      %785 = vset.pattern.permute.xlu0 0
      %786 = vperm.xlu0 %785, %v642
      %v787 = vpop.permute.xlu0 %786
      %v789 = vmul.f32 %v625, %v782
      %v790 = vmul.f32 %v617, %v782
      %v791 = vmul.f32 %v627, %v782
      %v792 = vmul.f32 %v626, %v787
      %v793 = vmul.f32 %v618, %v787
      %v794 = vmul.f32 %v628, %v787
      %801 = vrot.lane.b32.xlu0 %v789, 112
      %v802 = vpop.permute.xlu0 %801
      %803 = vrot.lane.b32.xlu0 %v790, 112
      %v804 = vpop.permute.xlu0 %803
      %805 = vrot.lane.b32.xlu0 %v791, 112
      %v806 = vpop.permute.xlu0 %805
      %807 = vrot.lane.b32.xlu0 %v792, 112
      %v808 = vpop.permute.xlu0 %807
      %809 = vrot.lane.b32.xlu0 %v793, 112
      %v810 = vpop.permute.xlu0 %809
      %811 = vrot.lane.b32.xlu0 %v794, 112
      %v812 = vpop.permute.xlu0 %811
      %v813 = vsel %vm703, %v802, %v804
      %v814 = vsel %vm703, %v804, %v806
      %v815 = vsel %vm703, %v808, %v810
      %v816 = vsel %vm703, %v810, %v812
      %v823 = vadd.f32 %v773, %v813
      %v824 = vadd.f32 %v774, %v814
      %v825 = vadd.f32 %v775, %v806
      %v826 = vadd.f32 %v776, %v815
      %v827 = vadd.f32 %v777, %v816
      %v828 = vadd.f32 %v778, %v812
      %830 = vset.pattern.permute.xlu0 0
      %831 = vperm.xlu0 %830, %v650
      %v832 = vpop.permute.xlu0 %831
      %835 = vset.pattern.permute.xlu0 0
      %836 = vperm.xlu0 %835, %v651
      %v837 = vpop.permute.xlu0 %836
      %v839 = vmul.f32 %v625, %v832
      %v840 = vmul.f32 %v617, %v832
      %v841 = vmul.f32 %v627, %v832
      %v842 = vmul.f32 %v626, %v837
      %v843 = vmul.f32 %v618, %v837
      %v844 = vmul.f32 %v628, %v837
      %851 = vrot.lane.b32.xlu0 %v839, 96
      %v852 = vpop.permute.xlu0 %851
      %853 = vrot.lane.b32.xlu0 %v840, 96
      %v854 = vpop.permute.xlu0 %853
      %855 = vrot.lane.b32.xlu0 %v841, 96
      %v856 = vpop.permute.xlu0 %855
      %857 = vrot.lane.b32.xlu0 %v842, 96
      %v858 = vpop.permute.xlu0 %857
      %859 = vrot.lane.b32.xlu0 %v843, 96
      %v860 = vpop.permute.xlu0 %859
      %861 = vrot.lane.b32.xlu0 %v844, 96
      %v862 = vpop.permute.xlu0 %861
      %v863 = vsel %vm750, %v852, %v854
      %v864 = vsel %vm750, %v854, %v856
      %v865 = vsel %vm750, %v858, %v860
      %v866 = vsel %vm750, %v860, %v862
      %v873 = vadd.f32 %v823, %v863
      %v874 = vadd.f32 %v824, %v864
      %v875 = vadd.f32 %v825, %v856
      %v876 = vadd.f32 %v826, %v865
      %v877 = vadd.f32 %v827, %v866
      %v878 = vadd.f32 %v828, %v862
      %880 = vset.pattern.permute.xlu0 0
      %881 = vperm.xlu0 %880, %v635
      %v882 = vpop.permute.xlu0 %881
      %885 = vset.pattern.permute.xlu0 0
      %886 = vperm.xlu0 %885, %v636
      %v887 = vpop.permute.xlu0 %886
      %v889 = vmul.f32 %v625, %v882
      %v890 = vmul.f32 %v617, %v882
      %v891 = vmul.f32 %v627, %v882
      %v892 = vmul.f32 %v626, %v887
      %v893 = vmul.f32 %v618, %v887
      %v894 = vmul.f32 %v628, %v887
      %896 = vset.pattern.permute.xlu0 0
      %897 = vperm.xlu0 %896, %v644
      %v898 = vpop.permute.xlu0 %897
      %901 = vset.pattern.permute.xlu0 0
      %902 = vperm.xlu0 %901, %v645
      %v903 = vpop.permute.xlu0 %902
      %v905 = vmul.f32 %v625, %v898
      %v906 = vmul.f32 %v617, %v898
      %v907 = vmul.f32 %v627, %v898
      %v908 = vmul.f32 %v626, %v903
      %v909 = vmul.f32 %v618, %v903
      %v910 = vmul.f32 %v628, %v903
      %917 = vrot.lane.b32.xlu0 %v905, 112
      %v918 = vpop.permute.xlu0 %917
      %919 = vrot.lane.b32.xlu0 %v906, 112
      %v920 = vpop.permute.xlu0 %919
      %921 = vrot.lane.b32.xlu0 %v907, 112
      %v922 = vpop.permute.xlu0 %921
      %923 = vrot.lane.b32.xlu0 %v908, 112
      %v924 = vpop.permute.xlu0 %923
      %925 = vrot.lane.b32.xlu0 %v909, 112
      %v926 = vpop.permute.xlu0 %925
      %927 = vrot.lane.b32.xlu0 %v910, 112
      %v928 = vpop.permute.xlu0 %927
      %v929 = vsel %vm703, %v918, %v920
      %v930 = vsel %vm703, %v920, %v922
      %v931 = vsel %vm703, %v924, %v926
      %v932 = vsel %vm703, %v926, %v928
      %v939 = vadd.f32 %v889, %v929
      %v940 = vadd.f32 %v890, %v930
      %v941 = vadd.f32 %v891, %v922
      %v942 = vadd.f32 %v892, %v931
      %v943 = vadd.f32 %v893, %v932
      %v944 = vadd.f32 %v894, %v928
      %946 = vset.pattern.permute.xlu0 0
      %947 = vperm.xlu0 %946, %v653
      %v948 = vpop.permute.xlu0 %947
      %951 = vset.pattern.permute.xlu0 0
      %952 = vperm.xlu0 %951, %v654
      %v953 = vpop.permute.xlu0 %952
      %v955 = vmul.f32 %v625, %v948
      %v956 = vmul.f32 %v617, %v948
      %v957 = vmul.f32 %v627, %v948
      %v958 = vmul.f32 %v626, %v953
      %v959 = vmul.f32 %v618, %v953
      %v960 = vmul.f32 %v628, %v953
      %967 = vrot.lane.b32.xlu0 %v955, 96
      %v968 = vpop.permute.xlu0 %967
      %969 = vrot.lane.b32.xlu0 %v956, 96
      %v970 = vpop.permute.xlu0 %969
      %971 = vrot.lane.b32.xlu0 %v957, 96
      %v972 = vpop.permute.xlu0 %971
      %973 = vrot.lane.b32.xlu0 %v958, 96
      %v974 = vpop.permute.xlu0 %973
      %975 = vrot.lane.b32.xlu0 %v959, 96
      %v976 = vpop.permute.xlu0 %975
      %977 = vrot.lane.b32.xlu0 %v960, 96
      %v978 = vpop.permute.xlu0 %977
      %v979 = vsel %vm750, %v968, %v970
      %v980 = vsel %vm750, %v970, %v972
      %v981 = vsel %vm750, %v974, %v976
      %v982 = vsel %vm750, %v976, %v978
      %v989 = vadd.f32 %v939, %v979
      %v990 = vadd.f32 %v940, %v980
      %v991 = vadd.f32 %v941, %v972
      %v992 = vadd.f32 %v942, %v981
      %v993 = vadd.f32 %v943, %v982
      %v994 = vadd.f32 %v944, %v978
      %vm995 = vcmp.ne.s32.totalorder %v309, 0
      %v996 = vsel %vm995, 1, 0
      %v997 = vperm.slane %v996, 0
      %v998 = vperm.slane %v996, 1
      %vm999 = vcmp.eq.s32.totalorder %v997, 1
      %vm1000 = vcmp.eq.s32.totalorder %v998, 1
      %v1001 = vsel %vm999, %v759, 0.0
      %v1002 = vsel %vm1000, %v760, 0.0
      %v1003 = vsel %vm999, %v761, 0.0
      %v1004 = vsel %vm1000, %v762, 0.0
      %1011 = vrot.lane.b32.xlu0 %v873, 127
      %v1012 = vpop.permute.xlu0 %1011
      %1013 = vrot.lane.b32.xlu0 %v874, 127
      %v1014 = vpop.permute.xlu0 %1013
      %1015 = vrot.lane.b32.xlu0 %v875, 127
      %v1016 = vpop.permute.xlu0 %1015
      %1017 = vrot.lane.b32.xlu0 %v876, 127
      %v1018 = vpop.permute.xlu0 %1017
      %1019 = vrot.lane.b32.xlu0 %v877, 127
      %v1020 = vpop.permute.xlu0 %1019
      %1021 = vrot.lane.b32.xlu0 %v878, 127
      %v1022 = vpop.permute.xlu0 %1021
      %vm1023 = vcmask 1039360
      %v1024 = vsel %vm1023, %v1012, %v1014
      %v1025 = vsel %vm1023, %v1014, %v1016
      %v1026 = vsel %vm1023, %v1018, %v1020
      %v1027 = vsel %vm1023, %v1020, %v1022
      %v1032 = vadd.f32 %v1001, %v1024
      %v1033 = vadd.f32 %v1002, %v1025
      %v1034 = vadd.f32 %v1003, %v1026
      %v1035 = vadd.f32 %v1004, %v1027
      %v1036 = vperm.slane %v311, 0
      %v1037 = vperm.slane %v311, 1
      %vm1038 = vcmp.eq.s32.totalorder %v1036, 1
      %vm1039 = vcmp.eq.s32.totalorder %v1037, 1
      %1046 = vrot.lane.b32.xlu0 %v989, 126
      %v1047 = vpop.permute.xlu0 %1046
      %1048 = vrot.lane.b32.xlu0 %v990, 126
      %v1049 = vpop.permute.xlu0 %1048
      %1050 = vrot.lane.b32.xlu0 %v991, 126
      %v1051 = vpop.permute.xlu0 %1050
      %1052 = vrot.lane.b32.xlu0 %v992, 126
      %v1053 = vpop.permute.xlu0 %1052
      %1054 = vrot.lane.b32.xlu0 %v993, 126
      %v1055 = vpop.permute.xlu0 %1054
      %1056 = vrot.lane.b32.xlu0 %v994, 126
      %v1057 = vpop.permute.xlu0 %1056
      %vm1058 = vcmask 1031168
      %v1059 = vsel %vm1058, %v1047, %v1049
      %v1060 = vsel %vm1058, %v1049, %v1051
      %v1061 = vsel %vm1058, %v1053, %v1055
      %v1062 = vsel %vm1058, %v1055, %v1057
      %v1067 = vsel %vm1038, %v1059, 0.0
      %v1068 = vsel %vm1039, %v1060, 0.0
      %v1069 = vsel %vm1038, %v1061, 0.0
      %v1070 = vsel %vm1039, %v1062, 0.0
      %v1071 = vadd.f32 %v1032, %v1067
      %v1072 = vadd.f32 %v1033, %v1068
      %v1073 = vadd.f32 %v1034, %v1069
      %v1074 = vadd.f32 %v1035, %v1070
      %v1075 = vld [vmem:[%s5] sm:$0xff]
      %v1076 = vld [vmem:[%s5 + $0x8] sm:$0xff]
      %1078 = vset.pattern.permute.xlu0 0
      %1079 = vperm.xlu0 %1078, %v1075
      %v1080 = vpop.permute.xlu0 %1079
      %1083 = vset.pattern.permute.xlu0 0
      %1084 = vperm.xlu0 %1083, %v1076
      %v1085 = vpop.permute.xlu0 %1084
      %v1087 = vadd.f32 %v1071, %v1080
      %v1088 = vadd.f32 %v1072, %v1080
      %v1089 = vadd.f32 %v1073, %v1085
      %v1090 = vadd.f32 %v1074, %v1085
      %v1091 = vmax.f32 %v1087, 0.0
      %v1092 = vmax.f32 %v1088, 0.0
      %v1093 = vmax.f32 %v1089, 0.0
      %v1094 = vmax.f32 %v1090, 0.0
      %v1095 = vld [vmem:[%s6] sm:$0xf]
      %v1096 = vld [vmem:[%s6 + $0x4] sm:$0xf]
      %v1097 = vpack.c.bf16 %v1093, %v1091
      %v1098 = vpack.c.bf16 %v1094, %v1092
      %v1099 = vld [vmem:[%s7] sm:$0xff]
      %v1100 = vld [vmem:[%s7 + $0x8] sm:$0xff]
      %1102 = vset.pattern.permute.xlu0 0
      %1103 = vperm.xlu0 %1102, %v1099
      %v1104 = vpop.permute.xlu0 %1103
      %1107 = vset.pattern.permute.xlu0 0
      %1108 = vperm.xlu0 %1107, %v1100
      %v1109 = vpop.permute.xlu0 %1108
      %v1113 = vunpack.c.l.b16 %v1095
      %v1114 = vunpack.c.l.b16 %v1096
      %v1115 = vpack.c.b16 %v1114, %v1113
      %vm1116 = vcmask 130048
      %v1118 = vsel %vm1116, %v1115, 0
      %1120 = vmatpush.bf16.msra.mxu0 0
      %1121 = vmatpush.bf16.msra.mxu0 0
      %1122 = vmatpush.bf16.msra.mxu0 0
      %1123 = vmatpush.bf16.msra.mxu0 0
      %1124 = vmatpush.bf16.msra.mxu0 0
      %1125 = vmatpush.bf16.msra.mxu0 0
      %1126 = vmatpush.bf16.msra.mxu0 0
      %1127 = vmatpush.bf16.msra.mxu0 %v1097
      %1128 = vmatmul.bf16.gmra.mxu0 %v1118
      %v1129 = vpop.f32.mrf.mxu0
      %v1130 = vadd.f32 %v1104, %v1129
      %v1131 = vpop.f32.mrf.mxu0
      %v1132 = vadd.f32 %v1109, %v1131
      %1133 = vdwg.mxu0
      %1134 = vmatpush.bf16.msra.mxu0 0
      %1135 = vmatpush.bf16.msra.mxu0 0
      %1136 = vmatpush.bf16.msra.mxu0 0
      %1137 = vmatpush.bf16.msra.mxu0 0
      %1138 = vmatpush.bf16.msra.mxu0 0
      %1139 = vmatpush.bf16.msra.mxu0 0
      %1140 = vmatpush.bf16.msra.mxu0 0
      %1141 = vmatpush.bf16.msra.mxu0 %v1098
      %1142 = vmatmul.bf16.gmra.mxu0 %v1118
      %v1143 = vpop.f32.mrf.mxu0
      %v1144 = vadd.f32 %v1104, %v1143
      %v1145 = vpop.f32.mrf.mxu0
      %v1146 = vadd.f32 %v1109, %v1145
      %1147 = vdwg.mxu0
      %v1148 = vadd.f32 %v1130, %v601
      %v1149 = vadd.f32 %v1144, %v602
      %v1150 = vadd.f32 %v1132, %v603
      %v1151 = vadd.f32 %v1146, %v604
      %1152 = vst [vmem:[%s305] sm:$0xff] %v1148
      %1153 = vst [vmem:[%s305 + $0x8] sm:$0xff] %v1149
      %1154 = vst [vmem:[%s305 + $0x10] sm:$0xff] %v1150
      %1155 = vst [vmem:[%s305 + $0x18] sm:$0xff] %v1151
      %p1156 = scmp.lt.s32.totalorder %s19, 1
      %s1157 = scalar_select %p1156, %s19, 1
      %s1158 = smul.addr %s1157, 4
      %s1159 = smul.addr %s1158, 8
      %s1160 = scalar_lea.vmem %s8, %s1159
      // Predicated region
      $region53: #{a_call__.1} parent=51 // pred_check
        %p1161 = pneg %p210
      $region54: #{a_call__.1} parent=51 // pred_check_branch
        %1163 = sbr.rel (%p1161) target = $region56
      $region55: #{a_call__.1} parent=51 // pred_region
        _
      $region56: #{a_call__.1} parent=51 // pred_fallthru
        _
    $region52: #{a_call__.1} parent=5 // pred_fallthru
      _
    %p1164 = scmp.le.s32.totalorder 2, %s14
    // Predicated region
    $region57: #{a_call__.1} parent=5 // pred_check
      %p1165 = pneg %p1164
    $region58: #{a_call__.1} parent=5 // pred_check_branch
      %1167 = sbr.rel (%p1165) target = $region60
    $region59: #{a_call__.1} parent=5 // pred_region
      %s1168 = ssub.s32 %s14, 2
      // Predicated region
      $region61: #{a_call__.1} parent=59 // pred_check
        %p1169 = pneg %p216
      $region62: #{a_call__.1} parent=59 // pred_check_branch
        %1171 = sbr.rel (%p1169) target = $region64
      $region63: #{a_call__.1} parent=59 // pred_region
        %p1172 = scmp.lt.s32.totalorder %s20, 1
        %s1173 = scalar_select %p1172, %s20, 1
        %s1174 = smul.addr %s1173, 4
        %s1175 = smul.addr %s1174, 8
        %s1176 = scalar_lea.vmem %s8, %s1175
      $region64: #{a_call__.1} parent=59 // pred_fallthru
        _
    $region60: #{a_call__.1} parent=5 // pred_fallthru
      _
  $region6: #{a_call__.1} parent=0 // loop_footer
    %s18 = sadd.s32 1, %s14
  $region7: #{a_call__.1} parent=0 // loop_footer_branch
    %13 = sbr.rel target = $region3
  $region8: #{a_call__.1} parent=0 // loop_exit
    _

</llo_original>
